<compile_context>
chip_gen: v7x
topology: tpu7x:2x2x1
jax: 0.10.0
libtpu: 0.0.40
codegen_flags: <defaults>
</compile_context>

<pallas_src>
import jax
import jax.numpy as jnp
from jax.experimental import pallas as pl
from jax.experimental.pallas import tpu as pltpu


def _make_dice_kernel(hw_valid, t_hw, num_chunks):
    """hw_valid: true spatial size; t_hw: lane tile; num_chunks: grid extent."""
    tail = hw_valid - (num_chunks - 1) * t_hw
    needs_mask = tail != t_hw  # last chunk reads past HW -> mask its columns

    def kernel(logits_ref, labels_ref, dice_ref, acc_i_ref, acc_p_ref, acc_t_ref):
        k = pl.program_id(1)

        @pl.when(k == 0)
        def _():
            acc_i_ref[...] = jnp.zeros_like(acc_i_ref)
            acc_p_ref[...] = jnp.zeros_like(acc_p_ref)
            acc_t_ref[...] = jnp.zeros_like(acc_t_ref)

        # Native-dtype load, f32 math (v5e has no bf16 VPU/EUP).
        x = logits_ref[0].astype(jnp.float32)       # (C, T)
        lab = labels_ref[0].astype(jnp.int32)       # (1, T)
        C, T = x.shape

        # Softmax over the class (sublane) axis; divide -> EUP reciprocal.
        m = jnp.max(x, axis=0, keepdims=True)
        e = jnp.exp(x - m)
        s = jnp.sum(e, axis=0, keepdims=True)       # (1, T)
        p = e * pl.reciprocal(s, approx=False)      # (C, T)

        # One-hot as a boolean mask (never materialized in f32 at full tile).
        cls = jax.lax.broadcasted_iota(jnp.int32, (C, T), 0)
        mask = cls == lab                           # (C, T) bool

        if needs_mask:
            # Last chunk contains out-of-bounds garbage: exclude those columns.
            col = jax.lax.broadcasted_iota(jnp.int32, (C, T), 1) + k * t_hw
            valid = col < hw_valid
            p = jnp.where(valid, p, 0.0)
            mask = jnp.logical_and(mask, valid)

        # Lane-axis (spatial) partial reductions -> tiny per-class accumulators.
        acc_i_ref[...] += jnp.sum(jnp.where(mask, p, 0.0), axis=1)[None, :]
        acc_p_ref[...] += jnp.sum(p, axis=1)[None, :]
        acc_t_ref[...] += jnp.sum(jnp.where(mask, 1.0, 0.0), axis=1)[None, :]

        @pl.when(k == pl.num_programs(1) - 1)
        def _():
            dice = 2.0 * acc_i_ref[...] / (acc_p_ref[...] + acc_t_ref[...] + 1e-19)
            dice_ref[...] = dice[None]              # (1, 1, C)

    return kernel


def dc_loss(output, target):
    """output: (N, C, H, W) float logits (any float dtype);
    target: (N, 1, H, W) integer class labels."""
    N, C, H, W = output.shape
    HW = H * W

    logits = output.reshape(N, C, HW)                       # no copy, native dtype
    label_dtype = jnp.int8 if C <= 127 else jnp.int32       # 1 B/px label stream
    labels = target.reshape(N, 1, HW).astype(label_dtype)

    # Lane tile budget: keep double-buffered input DMAs under ~8 MiB so the
    # pipeline fits v5e's 16 MiB scoped-VMEM default (and trivially v6e/v7x).
    itemsize = jnp.dtype(logits.dtype).itemsize
    lab_itemsize = jnp.dtype(label_dtype).itemsize
    budget = 8 * 1024 * 1024
    cap = budget // (2 * (C * itemsize + lab_itemsize))
    cap = max(128, min(65536, (cap // 128) * 128))

    if HW <= cap:
        t_hw = HW                 # full-dim block (allowed even if % 128 != 0)
        num_chunks = 1
    else:
        t_hw = cap                # multiple of 128
        num_chunks = pl.cdiv(HW, t_hw)

    dice = pl.pallas_call(
        _make_dice_kernel(HW, t_hw, num_chunks),
        out_shape=jax.ShapeDtypeStruct((N, 1, C), jnp.float32),
        grid=(N, num_chunks),
        in_specs=[
            pl.BlockSpec((1, C, t_hw), lambda n, k: (n, 0, k)),
            pl.BlockSpec((1, 1, t_hw), lambda n, k: (n, 0, k)),
        ],
        out_specs=pl.BlockSpec((1, 1, C), lambda n, k: (n, 0, 0)),
        scratch_shapes=[
            pltpu.VMEM((1, C), jnp.float32),   # intersect accumulator
            pltpu.VMEM((1, C), jnp.float32),   # sum_p accumulator
            pltpu.VMEM((1, C), jnp.float32),   # sum_t accumulator
        ],
        compiler_params=pltpu.CompilerParams(
            dimension_semantics=("parallel", "arbitrary")),
    )(logits, labels)

    # Final tiny mean over (N, C) stays in plain JAX (glue).
    return 1.0 - jnp.mean(dice)


def _reference_dc_loss(output, target):
    # Pure-JAX reference mirroring the PyTorch module.
    N, C, H, W = output.shape
    p = jax.nn.softmax(output.astype(jnp.float32), axis=1)
    onehot = jax.nn.one_hot(target[:, 0].astype(jnp.int32), C, axis=1,
                            dtype=jnp.float32)               # (N, C, H, W)
    intersect = jnp.sum(p * onehot, axis=(2, 3))
    dice = 2 * intersect / (jnp.sum(p, axis=(2, 3)) +
                            jnp.sum(onehot, axis=(2, 3)) + 1e-19)
    return 1.0 - jnp.mean(dice)


if __name__ == "__main__":
    key = jax.random.PRNGKey(0)

    # Case 1: toy shape, single HW chunk (128-multiple spatial size).
    k1, k2 = jax.random.split(key)
    N, C, H, W = 2, 4, 16, 16          # nb_classes = 4
    output = jax.random.normal(k1, (N, C, H, W), dtype=jnp.float32)
    target = jax.random.randint(k2, (N, 1, H, W), 0, C, dtype=jnp.int32)
    loss = jax.block_until_ready(dc_loss(output, target))
    ref = jax.block_until_ready(_reference_dc_loss(output, target))
    assert jnp.allclose(loss, ref, atol=1e-5, rtol=1e-5), (loss, ref)

    # Case 2: non-128-multiple spatial size -> full-dim single chunk, no pad.
    k3, k4 = jax.random.split(k1)
    N2, C2, H2, W2 = 2, 4, 50, 50
    output2 = jax.random.normal(k3, (N2, C2, H2, W2), dtype=jnp.float32)
    target2 = jax.random.randint(k4, (N2, 1, H2, W2), 0, C2, dtype=jnp.int32)
    loss2 = jax.block_until_ready(dc_loss(output2, target2))
    ref2 = jax.block_until_ready(_reference_dc_loss(output2, target2))
    assert jnp.allclose(loss2, ref2, atol=1e-5, rtol=1e-5), (loss2, ref2)

    print("KERNEL_OK")
</pallas_src>

<mosaic_0001>
module attributes {stable_mosaic.version = 11 : i64} {
  func.func @kernel(%arg0: i32, %arg1: i32, %arg2: memref<1x4x256xf32, #tpu.memory_space<vmem>>, %arg3: memref<1x1x256xi8, #tpu.memory_space<vmem>>, %arg4: memref<1x1x4xf32, #tpu.memory_space<vmem>>, %arg5: memref<1x4xf32, #tpu.memory_space<vmem>>, %arg6: memref<1x4xf32, #tpu.memory_space<vmem>>, %arg7: memref<1x4xf32, #tpu.memory_space<vmem>>) attributes {dimension_semantics = [#tpu.dimension_semantics<parallel>, #tpu.dimension_semantics<arbitrary>], iteration_bounds = array<i64: 2, 1>, scalar_prefetch = 0 : i64, scratch_operands = 3 : i64, tpu.core_type = #tpu.core_type<tc>, window_params = [{transform_indices = @transform_0, window_bounds = array<i64: 1, 4, 256>}, {transform_indices = @transform_1, window_bounds = array<i64: 1, 1, 256>}, {transform_indices = @transform_2, window_bounds = array<i64: 1, 1, 4>}]} {
    %c0_i32 = arith.constant 0 : i32
    %0 = arith.cmpi eq, %arg1, %c0_i32 : i32
    %1 = arith.extui %0 : i1 to i32
    %c0_i32_0 = arith.constant 0 : i32
    %2 = arith.cmpi ne, %1, %c0_i32_0 : i32
    scf.if %2 {
      %cst_27 = arith.constant 0.000000e+00 : f32
      %44 = vector.broadcast %cst_27 : f32 to vector<1x4xf32>
      %c0_28 = arith.constant 0 : index
      %c0_29 = arith.constant 0 : index
      %45 = vector.load %arg5[%c0_28, %c0_29] : memref<1x4xf32, #tpu.memory_space<vmem>>, vector<1x4xf32>
      tpu.vector_store %arg5[%c0_28, %c0_29], %44 {strides = array<i32>} : memref<1x4xf32, #tpu.memory_space<vmem>>, vector<1x4xf32>,
      %cst_30 = arith.constant 0.000000e+00 : f32
      %46 = vector.broadcast %cst_30 : f32 to vector<1x4xf32>
      %c0_31 = arith.constant 0 : index
      %c0_32 = arith.constant 0 : index
      %47 = vector.load %arg6[%c0_31, %c0_32] : memref<1x4xf32, #tpu.memory_space<vmem>>, vector<1x4xf32>
      tpu.vector_store %arg6[%c0_31, %c0_32], %46 {strides = array<i32>} : memref<1x4xf32, #tpu.memory_space<vmem>>, vector<1x4xf32>,
      %cst_33 = arith.constant 0.000000e+00 : f32
      %48 = vector.broadcast %cst_33 : f32 to vector<1x4xf32>
      %c0_34 = arith.constant 0 : index
      %c0_35 = arith.constant 0 : index
      %49 = vector.load %arg7[%c0_34, %c0_35] : memref<1x4xf32, #tpu.memory_space<vmem>>, vector<1x4xf32>
      tpu.vector_store %arg7[%c0_34, %c0_35], %48 {strides = array<i32>} : memref<1x4xf32, #tpu.memory_space<vmem>>, vector<1x4xf32>,
    } else {
    }
    %c0 = arith.constant 0 : index
    %c0_1 = arith.constant 0 : index
    %c0_2 = arith.constant 0 : index
    %3 = vector.load %arg2[%c0, %c0_1, %c0_2] : memref<1x4x256xf32, #tpu.memory_space<vmem>>, vector<1x4x256xf32>
    %4 = vector.shape_cast %3 : vector<1x4x256xf32> to vector<4x256xf32>
    %c0_3 = arith.constant 0 : index
    %c0_4 = arith.constant 0 : index
    %c0_5 = arith.constant 0 : index
    %5 = vector.load %arg3[%c0_3, %c0_4, %c0_5] : memref<1x1x256xi8, #tpu.memory_space<vmem>>, vector<1x1x256xi8>
    %6 = vector.shape_cast %5 : vector<1x1x256xi8> to vector<1x256xi8>
    %7 = arith.extsi %6 : vector<1x256xi8> to vector<1x256xi32>
    %cst = arith.constant dense<0xFF800000> : vector<256xf32>
    %8 = vector.multi_reduction <maximumf>, %4, %cst [0] : vector<4x256xf32> to vector<256xf32>
    %9 = vector.shape_cast %8 : vector<256xf32> to vector<1x256xf32>
    %10 = vector.broadcast %9 : vector<1x256xf32> to vector<4x256xf32>
    %11 = arith.subf %4, %10 : vector<4x256xf32>
    %12 = math.exp %11 : vector<4x256xf32>
    %cst_6 = arith.constant dense<0.000000e+00> : vector<256xf32>
    %13 = vector.multi_reduction <add>, %12, %cst_6 [0] : vector<4x256xf32> to vector<256xf32>
    %14 = vector.shape_cast %13 : vector<256xf32> to vector<1x256xf32>
    %15 = tpu.reciprocal %14 : vector<1x256xf32> -> vector<1x256xf32>
    %16 = vector.broadcast %15 : vector<1x256xf32> to vector<4x256xf32>
    %17 = arith.mulf %12, %16 : vector<4x256xf32>
    %18 = tpu.iota {dimensions = array<i32: 0>} : vector<4x256xi32>
    %19 = vector.broadcast %7 : vector<1x256xi32> to vector<4x256xi32>
    %20 = arith.cmpi eq, %18, %19 : vector<4x256xi32>
    %c0_7 = arith.constant 0 : index
    %c0_8 = arith.constant 0 : index
    %21 = vector.load %arg5[%c0_7, %c0_8] : memref<1x4xf32, #tpu.memory_space<vmem>>, vector<1x4xf32>
    %cst_9 = arith.constant 0.000000e+00 : f32
    %22 = vector.broadcast %cst_9 : f32 to vector<4x256xf32>
    %23 = arith.select %20, %17, %22 : vector<4x256xi1>, vector<4x256xf32>
    %cst_10 = arith.constant dense<0.000000e+00> : vector<4xf32>
    %24 = vector.multi_reduction <add>, %23, %cst_10 [1] : vector<4x256xf32> to vector<4xf32>
    %25 = vector.shape_cast %24 : vector<4xf32> to vector<1x4xf32>
    %26 = arith.addf %21, %25 : vector<1x4xf32>
    %c0_11 = arith.constant 0 : index
    %c0_12 = arith.constant 0 : index
    %27 = vector.load %arg5[%c0_11, %c0_12] : memref<1x4xf32, #tpu.memory_space<vmem>>, vector<1x4xf32>
    tpu.vector_store %arg5[%c0_11, %c0_12], %26 {strides = array<i32>} : memref<1x4xf32, #tpu.memory_space<vmem>>, vector<1x4xf32>,
    %c0_13 = arith.constant 0 : index
    %c0_14 = arith.constant 0 : index
    %28 = vector.load %arg6[%c0_13, %c0_14] : memref<1x4xf32, #tpu.memory_space<vmem>>, vector<1x4xf32>
    %cst_15 = arith.constant dense<0.000000e+00> : vector<4xf32>
    %29 = vector.multi_reduction <add>, %17, %cst_15 [1] : vector<4x256xf32> to vector<4xf32>
    %30 = vector.shape_cast %29 : vector<4xf32> to vector<1x4xf32>
    %31 = arith.addf %28, %30 : vector<1x4xf32>
    %c0_16 = arith.constant 0 : index
    %c0_17 = arith.constant 0 : index
    %32 = vector.load %arg6[%c0_16, %c0_17] : memref<1x4xf32, #tpu.memory_space<vmem>>, vector<1x4xf32>
    tpu.vector_store %arg6[%c0_16, %c0_17], %31 {strides = array<i32>} : memref<1x4xf32, #tpu.memory_space<vmem>>, vector<1x4xf32>,
    %c0_18 = arith.constant 0 : index
    %c0_19 = arith.constant 0 : index
    %33 = vector.load %arg7[%c0_18, %c0_19] : memref<1x4xf32, #tpu.memory_space<vmem>>, vector<1x4xf32>
    %cst_20 = arith.constant 1.000000e+00 : f32
    %cst_21 = arith.constant 0.000000e+00 : f32
    %34 = vector.broadcast %cst_20 : f32 to vector<4x256xf32>
    %35 = vector.broadcast %cst_21 : f32 to vector<4x256xf32>
    %36 = arith.select %20, %34, %35 : vector<4x256xi1>, vector<4x256xf32>
    %cst_22 = arith.constant dense<0.000000e+00> : vector<4xf32>
    %37 = vector.multi_reduction <add>, %36, %cst_22 [1] : vector<4x256xf32> to vector<4xf32>
    %38 = vector.shape_cast %37 : vector<4xf32> to vector<1x4xf32>
    %39 = arith.addf %33, %38 : vector<1x4xf32>
    %c0_23 = arith.constant 0 : index
    %c0_24 = arith.constant 0 : index
    %40 = vector.load %arg7[%c0_23, %c0_24] : memref<1x4xf32, #tpu.memory_space<vmem>>, vector<1x4xf32>
    tpu.vector_store %arg7[%c0_23, %c0_24], %39 {strides = array<i32>} : memref<1x4xf32, #tpu.memory_space<vmem>>, vector<1x4xf32>,
    %c0_i32_25 = arith.constant 0 : i32
    %41 = arith.cmpi eq, %arg1, %c0_i32_25 : i32
    %42 = arith.extui %41 : i1 to i32
    %c0_i32_26 = arith.constant 0 : i32
    %43 = arith.cmpi ne, %42, %c0_i32_26 : i32
    scf.if %43 {
      %c0_27 = arith.constant 0 : index
      %c0_28 = arith.constant 0 : index
      %44 = vector.load %arg5[%c0_27, %c0_28] : memref<1x4xf32, #tpu.memory_space<vmem>>, vector<1x4xf32>
      %cst_29 = arith.constant 2.000000e+00 : f32
      %45 = vector.broadcast %cst_29 : f32 to vector<1x4xf32>
      %46 = arith.mulf %45, %44 : vector<1x4xf32>
      %c0_30 = arith.constant 0 : index
      %c0_31 = arith.constant 0 : index
      %47 = vector.load %arg6[%c0_30, %c0_31] : memref<1x4xf32, #tpu.memory_space<vmem>>, vector<1x4xf32>
      %c0_32 = arith.constant 0 : index
      %c0_33 = arith.constant 0 : index
      %48 = vector.load %arg7[%c0_32, %c0_33] : memref<1x4xf32, #tpu.memory_space<vmem>>, vector<1x4xf32>
      %49 = arith.addf %47, %48 : vector<1x4xf32>
      %cst_34 = arith.constant 9.99999968E-20 : f32
      %50 = vector.broadcast %cst_34 : f32 to vector<1x4xf32>
      %51 = arith.addf %49, %50 : vector<1x4xf32>
      %52 = arith.divf %46, %51 : vector<1x4xf32>
      %53 = vector.shape_cast %52 : vector<1x4xf32> to vector<1x1x4xf32>
      %c0_35 = arith.constant 0 : index
      %c0_36 = arith.constant 0 : index
      %c0_37 = arith.constant 0 : index
      %54 = vector.load %arg4[%c0_35, %c0_36, %c0_37] : memref<1x1x4xf32, #tpu.memory_space<vmem>>, vector<1x1x4xf32>
      tpu.vector_store %arg4[%c0_35, %c0_36, %c0_37], %53 {strides = array<i32>} : memref<1x1x4xf32, #tpu.memory_space<vmem>>, vector<1x1x4xf32>,
    } else {
    }
    return
  }
  func.func @transform_0(%arg0: i32, %arg1: i32) -> (i32, i32, i32) {
    %c0_i32 = arith.constant 0 : i32
    %c0_i32_0 = arith.constant 0 : i32
    return %arg0, %c0_i32, %arg1 : i32, i32, i32
  }
  func.func @transform_1(%arg0: i32, %arg1: i32) -> (i32, i32, i32) {
    %c0_i32 = arith.constant 0 : i32
    %c0_i32_0 = arith.constant 0 : i32
    return %arg0, %c0_i32, %arg1 : i32, i32, i32
  }
  func.func @transform_2(%arg0: i32, %arg1: i32) -> (i32, i32, i32) {
    %c0_i32 = arith.constant 0 : i32
    %c0_i32_0 = arith.constant 0 : i32
    %c0_i32_1 = arith.constant 0 : i32
    return %arg0, %c0_i32, %c0_i32_0 : i32, i32, i32
  }
}

</mosaic_0001>

<llo_original>
// kernel: tpu_custom_call.1
$region0: #{tpu_custom_call.1}
  #allocation0 [shape = 'u32[]', space=smem, size = 0x4, offset = 0x4, fixed_abs, tag = 'smem constant byte address 0x4 - core index']
  #allocation1 [shape = 'u32[144,128]{1,0:T(1,128)}', space=vmem, size = 0x12000, scoped, tag = 'internal scratch']
  #allocation2 [shape = 'f32[1,4]{1,0:T(1,128)}', space=vmem, size = 0x200, scoped, tag = 'scratch operand']
  #allocation3 [shape = 'f32[1,4]{1,0:T(1,128)}', space=vmem, size = 0x200, scoped, tag = 'scratch operand']
  #allocation4 [shape = 'f32[1,4]{1,0:T(1,128)}', space=vmem, size = 0x200, scoped, tag = 'scratch operand']
  %s0 = inlined_call_operand.hbm [shape: f32[2,4,256], index: 0, kind: input, shape index: {}]
  %s1 = inlined_call_operand.vmem [shape: s8[2,1,256], index: 1, kind: input, shape index: {}]
  %s2 = inlined_call_operand.hbm [shape: f32[2,1,4], index: 2, kind: output, shape index: {}]
  %s3 = sld [smem:[#allocation0]]
  $region53: #{tpu_custom_call.1} parent=0
    _
  %s5 = ssub.s32 1, %s3
  %s6 = scalar_select 0, %s5, %s3
  $region1: #{tpu_custom_call.1} parent=0
    #allocation5 [shape = 'u8[8192]{0}', space=vmem, size = 0x2000, scoped, tag = 'input window, operand 0']
    #allocation6 [shape = 's32[2]{0}', space=sflag, size = 0x8, scoped, tag = 'scoped memory for tpu_custom_call.1']
    #allocation7 [shape = 's32[2]{0}', space=sflag, size = 0x8, scoped, tag = 'scoped memory for tpu_custom_call.1']
    #allocation8 [shape = 'u8[1024]{0}', space=vmem, size = 0x400, scoped, tag = 'output window, operand 0']
    %7 = vsyncpa [#allocation6], 0
    %s8 = scalar_lea.sflag [#allocation6], 1
    %9 = vsyncpa %s8, 0
    %10 = vsyncpa [#allocation7], 0
    %s11 = scalar_lea.sflag [#allocation7], 1
    %12 = vsyncpa %s11, 0
    loop: start=0, step=1, limit=4
    $region2: #{tpu_custom_call.1} parent=1 // loop_pre_header
      _
    $region3: #{tpu_custom_call.1} parent=1 // loop_header
      %s14 = sphi 0, %s18
      %p15 = scmp.ge.s32.totalorder %s14, 4
      %s21 = sphi 0, %s33
      %s22 = sphi 0, %s29
      %s23 = sphi 0, %s21
      %s24 = sphi 0, %s22
      %s25 = sphi 0, %s23
      %s26 = sphi 0, %s24
      %s38 = sphi 0, %s40
      %s41 = sphi 0, %s38
      %s42 = sphi 0, %s41
      %s58 = sphi 0, %s42
      %s66 = sphi 0, %s68
      %s69 = sphi 0, %s66
      %s70 = sphi 0, %s69
      %s86 = sphi 0, %s70
      %s92 = sphi 0, %s94
      %s95 = sphi 0, %s92
      %s96 = sphi 0, %s95
      %s112 = sphi 0, %s96
    $region4: #{tpu_custom_call.1} parent=1 // loop_header_branch
      %17 = sbr.rel (%p15) target = $region8
    $region5: #{tpu_custom_call.1} parent=1 // loop_body
      %s19 = ssub.s32 %s14, 1
      %s20 = ssub.s32 %s14, 2
      %s27 = sadd.s32 1, %s22
      %p28 = scmp.ge.s32.totalorder %s27, 1
      %s29 = scalar_select %p28, 0, %s27
      %s30 = sadd.s32 1, %s21
      %s31 = scalar_select %p28, %s30, %s21
      %p32 = scmp.ge.s32.totalorder %s31, 2
      %s33 = scalar_select %p32, 0, %s31
      %s34 = ssub.s32 %s21, %s33
      %s35 = ssub.s32 %s22, %s29
      %s36 = sor.u32 %s34, %s35
      %p37 = scmp.eq.s32.totalorder %s36, 0
      %s39 = sadd.s32 %s38, 1
      %s40 = scalar_select %p37, %s38, %s39
      %p43 = pneg %p37
      %p44 = scmp.eq.s32.totalorder %s14, 1
      %p45 = por %p43, %p44
      %p46 = scmp.ne.s32.totalorder %s38, %s41
      %p47 = scmp.eq.s32.totalorder %s14, 0
      %p48 = por %p46, %p47
      %p49 = scmp.ne.s32.totalorder %s38, %s41
      %p50 = scmp.eq.s32.totalorder %s19, 1
      %p51 = por %p49, %p50
      %p52 = scmp.ne.s32.totalorder %s41, %s42
      %p53 = scmp.eq.s32.totalorder %s19, 0
      %p54 = por %p52, %p53
      %p55 = scmp.ne.s32.totalorder %s41, %s42
      %p56 = scmp.eq.s32.totalorder %s20, 1
      %p57 = por %p55, %p56
      %p59 = scmp.ne.s32.totalorder %s42, %s58
      %p60 = scmp.eq.s32.totalorder %s20, 0
      %p61 = por %p59, %p60
      %s62 = ssub.s32 %s21, %s33
      %s63 = ssub.s32 %s22, %s29
      %s64 = sor.u32 %s62, %s63
      %p65 = scmp.eq.s32.totalorder %s64, 0
      %s67 = sadd.s32 %s66, 1
      %s68 = scalar_select %p65, %s66, %s67
      %p71 = pneg %p65
      %p72 = scmp.eq.s32.totalorder %s14, 1
      %p73 = por %p71, %p72
      %p74 = scmp.ne.s32.totalorder %s66, %s69
      %p75 = scmp.eq.s32.totalorder %s14, 0
      %p76 = por %p74, %p75
      %p77 = scmp.ne.s32.totalorder %s66, %s69
      %p78 = scmp.eq.s32.totalorder %s19, 1
      %p79 = por %p77, %p78
      %p80 = scmp.ne.s32.totalorder %s69, %s70
      %p81 = scmp.eq.s32.totalorder %s19, 0
      %p82 = por %p80, %p81
      %p83 = scmp.ne.s32.totalorder %s69, %s70
      %p84 = scmp.eq.s32.totalorder %s20, 1
      %p85 = por %p83, %p84
      %p87 = scmp.ne.s32.totalorder %s70, %s86
      %p88 = scmp.eq.s32.totalorder %s20, 0
      %p89 = por %p87, %p88
      %s90 = ssub.s32 %s21, %s33
      %p91 = scmp.eq.s32.totalorder %s90, 0
      %s93 = sadd.s32 %s92, 1
      %s94 = scalar_select %p91, %s92, %s93
      %p97 = pneg %p91
      %p98 = scmp.eq.s32.totalorder %s14, 1
      %p99 = por %p97, %p98
      %p100 = scmp.ne.s32.totalorder %s92, %s95
      %p101 = scmp.eq.s32.totalorder %s14, 0
      %p102 = por %p100, %p101
      %p103 = scmp.ne.s32.totalorder %s92, %s95
      %p104 = scmp.eq.s32.totalorder %s19, 1
      %p105 = por %p103, %p104
      %p106 = scmp.ne.s32.totalorder %s95, %s96
      %p107 = scmp.eq.s32.totalorder %s19, 0
      %p108 = por %p106, %p107
      %p109 = scmp.ne.s32.totalorder %s95, %s96
      %p110 = scmp.eq.s32.totalorder %s20, 1
      %p111 = por %p109, %p110
      %p113 = scmp.ne.s32.totalorder %s96, %s112
      %p114 = scmp.eq.s32.totalorder %s20, 0
      %p115 = por %p113, %p114
      %p116 = scmp.le.s32.totalorder 1, %s14
      %p117 = scmp.lt.s32.totalorder %s14, 3
      %p118 = pnand %p116, %p117
      %p119 = pneg %p118
      // Predicated region
      $region9: #{tpu_custom_call.1} parent=5 // pred_check
        _
      $region10: #{tpu_custom_call.1} parent=5 // pred_check_branch
        %121 = sbr.rel (%p118) target = $region12
      $region11: #{tpu_custom_call.1} parent=5 // pred_region
        %s122 = ssub.s32 %s14, 1
      $region12: #{tpu_custom_call.1} parent=5 // pred_fallthru
        _
      %p123 = scmp.lt.s32.totalorder %s14, 2
      // Predicated region
      $region13: #{tpu_custom_call.1} parent=5 // pred_check
        %p124 = pneg %p123
      $region14: #{tpu_custom_call.1} parent=5 // pred_check_branch
        %126 = sbr.rel (%p124) target = $region16
      $region15: #{tpu_custom_call.1} parent=5 // pred_region
        // Predicated region
        $region17: #{tpu_custom_call.1} parent=15 // pred_check
          %p127 = pneg %p48
        $region18: #{tpu_custom_call.1} parent=15 // pred_check_branch
          %129 = sbr.rel (%p127) target = $region20
        $region19: #{tpu_custom_call.1} parent=15 // pred_region
          %s130 = sand.u32 %s38, 1
          %s131 = scalar_lea.sflag [#allocation6], %s130
          %s132 = sand.u32 %s38, 1
          %s133 = smul.addr %s132, 8
          %s134 = scalar_lea.vmem [#allocation5], %s133
          %s135 = smul.u32 2, %s22
          %s137 = ssub.s32 128, 128
          %138 = vsyncadd %s131, %s137
          %s139 = smul.addr %s21, 2
          %s140 = sadd.s32 %s135, %s139
          %s141 = smul.addr %s140, 64
          %s142 = scalar_lea.hbm %s0, %s141
          %s144 = sshll.u32 %s134, 4
          %s145 = int_to_ptr.vmem [resolvable:$true] %s144
          %147 = dma.hbm_to_vmem [thread:$0]  %s142, 128, %s145, %s131
        $region20: #{tpu_custom_call.1} parent=15 // pred_fallthru
          _
        // Predicated region
        $region21: #{tpu_custom_call.1} parent=15 // pred_check
          %p148 = pneg %p76
        $region22: #{tpu_custom_call.1} parent=15 // pred_check_branch
          %150 = sbr.rel (%p148) target = $region24
        $region23: #{tpu_custom_call.1} parent=15 // pred_region
          %s151 = smul.u32 2, %s22
          %p152 = scmp.lt.s32.totalorder %s21, 1
          %s153 = scalar_select %p152, %s21, 1
          %p154 = scmp.lt.s32.totalorder %s151, 1
          %s155 = scalar_select %p154, %s151, 1
          %s156 = smul.addr %s153, 2
          %s157 = sadd.s32 %s155, %s156
          %s158 = scalar_lea.vmem %s1, %s157
          %s159 = smul.u32 2, %s22
        $region24: #{tpu_custom_call.1} parent=15 // pred_fallthru
          _
      $region16: #{tpu_custom_call.1} parent=5 // pred_fallthru
        _
      %p160 = scmp.le.s32.totalorder 1, %s14
      %p161 = scmp.lt.s32.totalorder %s14, 3
      %p162 = pnand %p160, %p161
      %p163 = pneg %p162
      // Predicated region
      $region25: #{tpu_custom_call.1} parent=5 // pred_check
        _
      $region26: #{tpu_custom_call.1} parent=5 // pred_check_branch
        %165 = sbr.rel (%p162) target = $region28
      $region27: #{tpu_custom_call.1} parent=5 // pred_region
        %s166 = ssub.s32 %s14, 1
        %s167 = sand.u32 %s41, 1
        %s168 = scalar_lea.sflag [#allocation6], %s167
        %s169 = sand.u32 %s41, 1
        %s170 = smul.addr %s169, 8
        %s171 = scalar_lea.vmem [#allocation5], %s170
        // Predicated region
        $region29: #{tpu_custom_call.1} parent=27 // pred_check
          %p172 = pneg %p54
        $region30: #{tpu_custom_call.1} parent=27 // pred_check_branch
          %174 = sbr.rel (%p172) target = $region32
        $region31: #{tpu_custom_call.1} parent=27 // pred_region
          %175 = dma.done %s168, 128
        $region32: #{tpu_custom_call.1} parent=27 // pred_fallthru
          _
        %s176 = sand.u32 %s41, 1
        %s177 = scalar_lea.sflag [#allocation6], %s176
        %s178 = sand.u32 %s41, 1
        %s179 = smul.addr %s178, 8
        %s180 = scalar_lea.vmem [#allocation5], %s179
        %p181 = pneg %p54
        %p182 = pneg %p51
        %s183 = smul.u32 2, %s24
        %p184 = scmp.lt.s32.totalorder %s23, 1
        %s185 = scalar_select %p184, %s23, 1
        %p186 = scmp.lt.s32.totalorder %s183, 1
        %s187 = scalar_select %p186, %s183, 1
        %s188 = smul.addr %s185, 2
        %s189 = sadd.s32 %s187, %s188
        %s190 = scalar_lea.vmem %s1, %s189
        %p191 = pneg %p82
        %p192 = pneg %p79
        %p193 = pneg %p108
        %p194 = pneg %p105
        %s195 = sand.u32 %s95, 1
        %s196 = scalar_lea.sflag [#allocation7], %s195
        %s197 = sand.u32 %s95, 1
        %s198 = scalar_lea.vmem [#allocation8], %s197
        %s199 = smul.u32 2, %s24
        %s200 = smul.u32 2, %s24
        %p201 = scmp.lt.s32.totalorder %s23, 1
        %s202 = scalar_select %p201, %s23, 1
        %p203 = scmp.lt.s32.totalorder %s200, 1
        %s204 = scalar_select %p203, %s200, 1
        %s205 = smul.addr %s202, 2
        %s206 = sadd.s32 %s204, %s205
        %s207 = scalar_lea.vmem %s1, %s206
        %s208 = smul.u32 2, %s24
        %p209 = scmp.eq.s32.totalorder %s24, 0
        // Predicated region
        $region33: #{tpu_custom_call.1} parent=27 // pred_check
          %p210 = pneg %p209
        $region34: #{tpu_custom_call.1} parent=27 // pred_check_branch
          %212 = sbr.rel (%p210) target = $region36
        $region35: #{tpu_custom_call.1} parent=27 // pred_region
          %vm213 = vcmask 24576
          %214 = vst.msk [vmem:[#allocation2] sm:$0x1] %vm213, 0.0
          %215 = vst.msk [vmem:[#allocation3] sm:$0x1] %vm213, 0.0
          %216 = vst.msk [vmem:[#allocation4] sm:$0x1] %vm213, 0.0
        $region36: #{tpu_custom_call.1} parent=27 // pred_fallthru
          _
        %v217 = vld [vmem:[%s171] sm:$0xff]
        %v218 = vld [vmem:[%s207] sm:$0x3]
        %v219 = vunpack.c.0.s8 %v218
        %v221 = vcombine.high %v217, %v217
        %vm223 = vcmask 1043456
        %v224 = vsel %vm223, %v217, -inf
        %v225 = vrot.slane %v224, 4
        %v226 = vmax.f32 %v224, %v225
        %v227 = vrot.slane %v226, 2
        %v228 = vmax.f32 %v226, %v227
        %v229 = vrot.slane %v228, 1
        %v230 = vmax.f32 %v228, %v229
        %v231 = vsel %vm223, %v221, -inf
        %v232 = vrot.slane %v231, 4
        %v233 = vmax.f32 %v231, %v232
        %v234 = vrot.slane %v233, 2
        %v235 = vmax.f32 %v233, %v234
        %v236 = vrot.slane %v235, 1
        %v237 = vmax.f32 %v235, %v236
        %v240 = vcombine.low %v230, %v237
        %v242 = vsub.f32 %v217, %v240
        %v243 = vmul.f32 %v242, 1.442695
        %v244 = vpow.pop %v243
        %v246 = vcombine.high %v244, %v244
        %v248 = vsel %vm223, %v244, 0.0
        %v249 = vrot.slane %v248, 4
        %v250 = vadd.f32 %v248, %v249
        %v251 = vrot.slane %v250, 2
        %v252 = vadd.f32 %v250, %v251
        %v253 = vrot.slane %v252, 1
        %v254 = vadd.f32 %v252, %v253
        %v255 = vsel %vm223, %v246, 0.0
        %v256 = vrot.slane %v255, 4
        %v257 = vadd.f32 %v255, %v256
        %v258 = vrot.slane %v257, 2
        %v259 = vadd.f32 %v257, %v258
        %v260 = vrot.slane %v259, 1
        %v261 = vadd.f32 %v259, %v260
        %v262 = vrcp.pop %v254
        %v263 = vrcp.pop %v261
        %v266 = vcombine.low %v262, %v263
        %v268 = vmul.f32 %v244, %v266
        %v269 = vlaneseq
        %v270 = vshrl.u32 %v269, 7
        %v271 = vlaneseq
        %v272 = vshrl.u32 %v271, 7
        %v273 = vsub.s32 0, %v272
        %v274 = vrot.slane %v219, %v273
        %v275 = vlaneseq
        %v276 = vshrl.u32 %v275, 7
        %v277 = vsub.s32 4, %v276
        %v278 = vrot.slane %v219, %v277
        %v279 = vlaneseq
        %v280 = vshrl.u32 %v279, 7
        %v281 = vsub.s32 0, %v280
        %v282 = vrot.slane %v274, %v281
        %v283 = vlaneseq
        %v284 = vshrl.u32 %v283, 7
        %v285 = vsub.s32 0, %v284
        %v286 = vrot.slane %v278, %v285
        %vm287 = vcmp.eq.s32.totalorder %v270, %v282
        %vm288 = vcmp.eq.s32.totalorder %v270, %v286
        %v289 = vld [vmem:[#allocation2] sm:$0x1]
        %v291 = vcombine.high %v268, %v268
        %v293 = vsel %vm287, %v268, 0.0
        %v294 = vsel %vm288, %v291, 0.0
        %v295 = vsel %vm223, %v293, 0.0
        %v296 = vsel %vm223, %v294, 0.0
        %v297 = vadd.f32 %v295, %v296
        %298 = vadd.xlane.f32.xlu0 %v297
        %v299 = vpop.xlane.xlu0 %298
        %v301 = vlaneseq
        %v302 = vshrl.u32 %v301, 7
        %v303 = vsub.s32 0, %v302
        %v304 = vrot.slane %v299, %v303
        %v305 = vlaneseq
        %v306 = vshrl.u32 %v305, 7
        %v307 = vsub.s32 1, %v306
        %v308 = vrot.slane %v299, %v307
        %v309 = vlaneseq
        %v310 = vshrl.u32 %v309, 7
        %v311 = vsub.s32 2, %v310
        %v312 = vrot.slane %v299, %v311
        %v313 = vlaneseq
        %v314 = vshrl.u32 %v313, 7
        %v315 = vsub.s32 3, %v314
        %v316 = vrot.slane %v299, %v315
        %v317 = vcombine.low %v304, %v308
        %v318 = vcombine.low %v312, %v316
        %v320 = vunpack.c.l.s4 1966171168
        %v321 = vunpack.c.0.s8 %v320
        %v322 = vlaneseq
        %v323 = vshrl.u32 %v322, 7
        %v324 = vsub.s32 %v321, %v323
        %v325 = vrot.slane %v317, %v324
        %v327 = vunpack.c.l.s4 1966171168
        %v328 = vunpack.c.0.s8 %v327
        %v329 = vlaneseq
        %v330 = vshrl.u32 %v329, 7
        %v331 = vsub.s32 %v328, %v330
        %v332 = vrot.slane %v318, %v331
        %v333 = vcombine.low %v325, %v332
        %v335 = vunpack.c.l.s4 1966171168
        %v336 = vunpack.c.0.s8 %v335
        %v337 = vlaneseq
        %v338 = vshrl.u32 %v337, 7
        %v339 = vsub.s32 %v336, %v338
        %v340 = vrot.slane %v333, %v339
        %341 = vset.pattern.permute.xlu0 0
        %342 = vperm.xlu0 %341, %v340
        %v343 = vpop.permute.xlu0 %342
        %v344 = vlaneseq
        %v345 = vand.u32 %v344, 127
        %v346 = vlaneseq
        %v347 = vshrl.u32 %v346, 7
        %v348 = vsub.s32 %v345, %v347
        %v349 = vrot.slane %v343, %v348
        %v351 = vunpack.c.l.s4 1966171168
        %v352 = vunpack.c.0.s8 %v351
        %v353 = vlaneseq
        %v354 = vshrl.u32 %v353, 7
        %v355 = vsub.s32 %v352, %v354
        %v356 = vrot.slane %v349, %v355
        %v358 = vunpack.c.l.s4 1966171168
        %v359 = vunpack.c.0.s8 %v358
        %v360 = vlaneseq
        %v361 = vshrl.u32 %v360, 7
        %v362 = vsub.s32 %v359, %v361
        %v363 = vrot.slane %v356, %v362
        %v365 = vadd.f32 %v289, %v363
        %vm366 = vcmask 24576
        %367 = vst.msk [vmem:[#allocation2] sm:$0x1] %vm366, %v365
        %v368 = vld [vmem:[#allocation3] sm:$0x1]
        %v369 = vsel %vm223, %v268, 0.0
        %v370 = vsel %vm223, %v291, 0.0
        %v371 = vadd.f32 %v369, %v370
        %372 = vadd.xlane.f32.xlu0 %v371
        %v373 = vpop.xlane.xlu0 %372
        %v375 = vlaneseq
        %v376 = vshrl.u32 %v375, 7
        %v377 = vsub.s32 0, %v376
        %v378 = vrot.slane %v373, %v377
        %v379 = vlaneseq
        %v380 = vshrl.u32 %v379, 7
        %v381 = vsub.s32 1, %v380
        %v382 = vrot.slane %v373, %v381
        %v383 = vlaneseq
        %v384 = vshrl.u32 %v383, 7
        %v385 = vsub.s32 2, %v384
        %v386 = vrot.slane %v373, %v385
        %v387 = vlaneseq
        %v388 = vshrl.u32 %v387, 7
        %v389 = vsub.s32 3, %v388
        %v390 = vrot.slane %v373, %v389
        %v391 = vcombine.low %v378, %v382
        %v392 = vcombine.low %v386, %v390
        %v394 = vunpack.c.l.s4 1966171168
        %v395 = vunpack.c.0.s8 %v394
        %v396 = vlaneseq
        %v397 = vshrl.u32 %v396, 7
        %v398 = vsub.s32 %v395, %v397
        %v399 = vrot.slane %v391, %v398
        %v401 = vunpack.c.l.s4 1966171168
        %v402 = vunpack.c.0.s8 %v401
        %v403 = vlaneseq
        %v404 = vshrl.u32 %v403, 7
        %v405 = vsub.s32 %v402, %v404
        %v406 = vrot.slane %v392, %v405
        %v407 = vcombine.low %v399, %v406
        %v409 = vunpack.c.l.s4 1966171168
        %v410 = vunpack.c.0.s8 %v409
        %v411 = vlaneseq
        %v412 = vshrl.u32 %v411, 7
        %v413 = vsub.s32 %v410, %v412
        %v414 = vrot.slane %v407, %v413
        %415 = vset.pattern.permute.xlu0 0
        %416 = vperm.xlu0 %415, %v414
        %v417 = vpop.permute.xlu0 %416
        %v418 = vlaneseq
        %v419 = vshrl.u32 %v418, 7
        %v420 = vsub.s32 %v345, %v419
        %v421 = vrot.slane %v417, %v420
        %v423 = vunpack.c.l.s4 1966171168
        %v424 = vunpack.c.0.s8 %v423
        %v425 = vlaneseq
        %v426 = vshrl.u32 %v425, 7
        %v427 = vsub.s32 %v424, %v426
        %v428 = vrot.slane %v421, %v427
        %v430 = vunpack.c.l.s4 1966171168
        %v431 = vunpack.c.0.s8 %v430
        %v432 = vlaneseq
        %v433 = vshrl.u32 %v432, 7
        %v434 = vsub.s32 %v431, %v433
        %v435 = vrot.slane %v428, %v434
        %v437 = vadd.f32 %v368, %v435
        %438 = vst.msk [vmem:[#allocation3] sm:$0x1] %vm366, %v437
        %v439 = vld [vmem:[#allocation4] sm:$0x1]
        %v440 = vsel %vm287, 1.0, 0.0
        %v441 = vsel %vm288, 1.0, 0.0
        %v442 = vsel %vm223, %v440, 0.0
        %v443 = vsel %vm223, %v441, 0.0
        %v444 = vadd.f32 %v442, %v443
        %445 = vadd.xlane.f32.xlu0 %v444
        %v446 = vpop.xlane.xlu0 %445
        %v448 = vlaneseq
        %v449 = vshrl.u32 %v448, 7
        %v450 = vsub.s32 0, %v449
        %v451 = vrot.slane %v446, %v450
        %v452 = vlaneseq
        %v453 = vshrl.u32 %v452, 7
        %v454 = vsub.s32 1, %v453
        %v455 = vrot.slane %v446, %v454
        %v456 = vlaneseq
        %v457 = vshrl.u32 %v456, 7
        %v458 = vsub.s32 2, %v457
        %v459 = vrot.slane %v446, %v458
        %v460 = vlaneseq
        %v461 = vshrl.u32 %v460, 7
        %v462 = vsub.s32 3, %v461
        %v463 = vrot.slane %v446, %v462
        %v464 = vcombine.low %v451, %v455
        %v465 = vcombine.low %v459, %v463
        %v467 = vunpack.c.l.s4 1966171168
        %v468 = vunpack.c.0.s8 %v467
        %v469 = vlaneseq
        %v470 = vshrl.u32 %v469, 7
        %v471 = vsub.s32 %v468, %v470
        %v472 = vrot.slane %v464, %v471
        %v474 = vunpack.c.l.s4 1966171168
        %v475 = vunpack.c.0.s8 %v474
        %v476 = vlaneseq
        %v477 = vshrl.u32 %v476, 7
        %v478 = vsub.s32 %v475, %v477
        %v479 = vrot.slane %v465, %v478
        %v480 = vcombine.low %v472, %v479
        %v482 = vunpack.c.l.s4 1966171168
        %v483 = vunpack.c.0.s8 %v482
        %v484 = vlaneseq
        %v485 = vshrl.u32 %v484, 7
        %v486 = vsub.s32 %v483, %v485
        %v487 = vrot.slane %v480, %v486
        %488 = vset.pattern.permute.xlu0 0
        %489 = vperm.xlu0 %488, %v487
        %v490 = vpop.permute.xlu0 %489
        %v491 = vlaneseq
        %v492 = vshrl.u32 %v491, 7
        %v493 = vsub.s32 %v345, %v492
        %v494 = vrot.slane %v490, %v493
        %v496 = vunpack.c.l.s4 1966171168
        %v497 = vunpack.c.0.s8 %v496
        %v498 = vlaneseq
        %v499 = vshrl.u32 %v498, 7
        %v500 = vsub.s32 %v497, %v499
        %v501 = vrot.slane %v494, %v500
        %v503 = vunpack.c.l.s4 1966171168
        %v504 = vunpack.c.0.s8 %v503
        %v505 = vlaneseq
        %v506 = vshrl.u32 %v505, 7
        %v507 = vsub.s32 %v504, %v506
        %v508 = vrot.slane %v501, %v507
        %v510 = vadd.f32 %v439, %v508
        %511 = vst.msk [vmem:[#allocation4] sm:$0x1] %vm366, %v510
        // Predicated region
        $region37: #{tpu_custom_call.1} parent=27 // pred_check
          %p512 = pneg %p209
        $region38: #{tpu_custom_call.1} parent=27 // pred_check_branch
          %514 = sbr.rel (%p512) target = $region40
        $region39: #{tpu_custom_call.1} parent=27 // pred_region
          %v515 = vld [vmem:[#allocation2] sm:$0x1]
          %v516 = vmul.f32 %v515, 2.0
          %v517 = vld [vmem:[#allocation3] sm:$0x1]
          %v518 = vld [vmem:[#allocation4] sm:$0x1]
          %v519 = vadd.f32 %v517, %v518
          %v520 = vadd.f32 %v519, 1e-19
          %v521 = vrcp.pop %v520
          %v522 = vmul.f32 %v516, %v521
          %523 = vst.msk [vmem:[%s198] sm:$0x1] %vm366, %v522
        $region40: #{tpu_custom_call.1} parent=27 // pred_fallthru
          _
        %s524 = sand.u32 %s95, 1
        %s525 = scalar_lea.sflag [#allocation7], %s524
        %s526 = sand.u32 %s95, 1
        %s527 = scalar_lea.vmem [#allocation8], %s526
        // Predicated region
        $region41: #{tpu_custom_call.1} parent=27 // pred_check
          %p528 = pneg %p105
        $region42: #{tpu_custom_call.1} parent=27 // pred_check_branch
          %530 = sbr.rel (%p528) target = $region44
        $region43: #{tpu_custom_call.1} parent=27 // pred_region
          %s532 = ssub.s32 16, 16
          %533 = vsyncadd %s525, %s532
          %s534 = smul.addr %s23, 16
          %s535 = scalar_lea.hbm %s2, %s534
          %s537 = sshll.u32 %s527, 4
          %s538 = int_to_ptr.vmem [resolvable:$true] %s537
          %540 = dma.vmem_to_hbm [thread:$0]  %s538, 16, %s535, %s525
        $region44: #{tpu_custom_call.1} parent=27 // pred_fallthru
          _
      $region28: #{tpu_custom_call.1} parent=5 // pred_fallthru
        _
      %p541 = scmp.le.s32.totalorder 2, %s14
      // Predicated region
      $region45: #{tpu_custom_call.1} parent=5 // pred_check
        %p542 = pneg %p541
      $region46: #{tpu_custom_call.1} parent=5 // pred_check_branch
        %544 = sbr.rel (%p542) target = $region48
      $region47: #{tpu_custom_call.1} parent=5 // pred_region
        %s545 = ssub.s32 %s14, 2
        // Predicated region
        $region49: #{tpu_custom_call.1} parent=47 // pred_check
          %p546 = pneg %p111
        $region50: #{tpu_custom_call.1} parent=47 // pred_check_branch
          %548 = sbr.rel (%p546) target = $region52
        $region51: #{tpu_custom_call.1} parent=47 // pred_region
          %s549 = sand.u32 %s96, 1
          %s550 = scalar_lea.sflag [#allocation7], %s549
          %s551 = sand.u32 %s96, 1
          %s552 = scalar_lea.vmem [#allocation8], %s551
          %553 = dma.done %s550, 16
        $region52: #{tpu_custom_call.1} parent=47 // pred_fallthru
          _
      $region48: #{tpu_custom_call.1} parent=5 // pred_fallthru
        _
    $region6: #{tpu_custom_call.1} parent=1 // loop_footer
      %s18 = sadd.s32 1, %s14
    $region7: #{tpu_custom_call.1} parent=1 // loop_footer_branch
      %13 = sbr.rel target = $region3
    $region8: #{tpu_custom_call.1} parent=1 // loop_exit
      _
    %554 = vsyncpa [#allocation6], 1
    %s555 = scalar_lea.sflag [#allocation6], 1
    %556 = vsyncpa %s555, 1
    %557 = vsyncpa [#allocation7], 1
    %s558 = scalar_lea.sflag [#allocation7], 1
    %559 = vsyncpa %s558, 1

</llo_original>
